<compile_context>
chip_gen: v7x
topology: tpu7x:2x2x1
jax: 0.10.0
libtpu: 0.0.40
codegen_flags: <defaults>
</compile_context>

<pallas_src>
import numpy as np
import jax
import jax.numpy as jnp
from jax.experimental import pallas as pl
from jax.experimental.pallas import tpu as pltpu


def _upsample_kernel(x_ref, w_ref, b_ref, o_ref, col_ref):
    # x_ref : (Nb, H, W, Cin)     one batch-block of NHWC input (unpadded)
    # w_ref : (9*Cin, 4*Cout)     im2col-fused ConvTranspose2d weight
    # b_ref : (1, 4*Cout)         bias tiled over the four output parities
    # o_ref : (Nb, H, W, 4*Cout)  channel (2a+b)*Cout + c  ==  y[2i+a, 2j+b, c]
    # col_ref: VMEM scratch (Nb, H, W, 9*Cin) — im2col patches, zero pad folded in
    Nb, H, W, Cin = x_ref.shape
    K = col_ref.shape[-1]
    No = o_ref.shape[-1]

    # Build the 3x3 im2col patches with the conv-transpose zero padding folded
    # in (border entries of the scratch stay zero).
    col_ref[...] = jnp.zeros_like(col_ref)
    x = x_ref[...]
    t = 0
    for dh in (-1, 0, 1):
        r0, r1 = max(0, -dh), H - max(0, dh)      # dest rows i with 0 <= i+dh < H
        for dw in (-1, 0, 1):
            c0, c1 = max(0, -dw), W - max(0, dw)
            col_ref[:, r0:r1, c0:c1, t * Cin:(t + 1) * Cin] = (
                x[:, r0 + dh:r1 + dh, c0 + dw:c1 + dw, :])
            t += 1

    # One MXU contraction for all taps and all four output parities.
    patches = col_ref[...].reshape(Nb * H * W, K)
    acc = jax.lax.dot_general(
        patches, w_ref[...],
        dimension_numbers=(((1,), (0,)), ((), ())),
        preferred_element_type=jnp.float32)
    acc = acc + b_ref[...]                         # bias added once (f32)
    o_ref[...] = acc.reshape(Nb, H, W, No).astype(o_ref.dtype)


def _fuse_weight(weight):
    """(Cin, Cout, 4, 4) PyTorch ConvTranspose2d weight -> (9*Cin, 4*Cout).

    W_big[t*Cin + ci, (2a+b)*Cout + co] = weight[ci, co, kh, kw] with
    t = (dh+1)*3 + (dw+1), kh = a + 1 - 2*dh, kw = b + 1 - 2*dw (zero block if
    the tap falls outside the 4x4 kernel).
    """
    Cin, Cout = weight.shape[0], weight.shape[1]
    zeros = jnp.zeros((Cin, Cout), weight.dtype)
    rows = []
    for dh in (-1, 0, 1):
        for dw in (-1, 0, 1):
            blocks = []
            for a in (0, 1):
                kh = a + 1 - 2 * dh
                for b in (0, 1):
                    kw = b + 1 - 2 * dw
                    if 0 <= kh < 4 and 0 <= kw < 4:
                        blocks.append(weight[:, :, kh, kw])
                    else:
                        blocks.append(zeros)
            rows.append(jnp.concatenate(blocks, axis=1))    # (Cin, 4*Cout)
    return jnp.concatenate(rows, axis=0)                     # (9*Cin, 4*Cout)


def upsample(x_nchw, weight, bias, *, batch_block=None, compute_dtype=None):
    """ConvTranspose2d(dim, dim, 4, 2, 1) forward.

    x_nchw : (N, Cin, H, W)
    weight : (Cin, Cout, 4, 4)   (PyTorch ConvTranspose2d layout)
    bias   : (Cout,)
    returns (N, Cout, 2H, 2W)
    compute_dtype: e.g. "bfloat16" to run the MXU contraction in bf16 with f32
                   accumulation (explicit precision tradeoff; default f32).
    """
    N, Cin, H, W = x_nchw.shape
    Cout = weight.shape[1]
    out_dtype = x_nchw.dtype
    cdt = jnp.dtype(compute_dtype) if compute_dtype is not None else jnp.dtype(out_dtype)

    # Fold batch into the matmul M dimension; for large N the grid still has
    # multiple parallel steps.
    if batch_block is None:
        batch_block = int(max(1, min(N, 512 // max(1, H * W))))
    nb = int(batch_block)
    grid_n = -(-N // nb)
    Np = grid_n * nb

    x = jnp.transpose(x_nchw, (0, 2, 3, 1)).astype(cdt)      # NHWC (layout glue)
    if Np != N:
        x = jnp.pad(x, ((0, Np - N), (0, 0), (0, 0), (0, 0)))

    w_big = _fuse_weight(weight).astype(cdt)                  # (9*Cin, 4*Cout)
    b_big = jnp.tile(bias.astype(jnp.float32), 4).reshape(1, 4 * Cout)

    K, No = 9 * Cin, 4 * Cout
    cost = pl.CostEstimate(
        flops=2 * Np * H * W * K * No,
        transcendentals=0,
        bytes_accessed=(x.size * x.dtype.itemsize
                        + w_big.size * w_big.dtype.itemsize
                        + b_big.size * b_big.dtype.itemsize
                        + Np * H * W * No * jnp.dtype(out_dtype).itemsize))

    out = pl.pallas_call(
        _upsample_kernel,
        out_shape=jax.ShapeDtypeStruct((Np, H, W, No), out_dtype),
        grid=(grid_n,),
        in_specs=[
            pl.BlockSpec((nb, H, W, Cin), lambda n: (n, 0, 0, 0)),
            pl.BlockSpec((K, No), lambda n: (0, 0)),
            pl.BlockSpec((1, No), lambda n: (0, 0)),
        ],
        out_specs=pl.BlockSpec((nb, H, W, No), lambda n: (n, 0, 0, 0)),
        scratch_shapes=[pltpu.VMEM((nb, H, W, K), cdt)],
        compiler_params=pltpu.CompilerParams(
            dimension_semantics=("parallel",)),
        cost_estimate=cost,
    )(x, w_big, b_big)

    out = out[:N]                                             # drop batch pad
    # (N, H, W, 4*Cout): channel (2a+b)*Cout + co  ->  y[n, co, 2i+a, 2j+b]
    y = out.reshape(N, H, W, 2, 2, Cout)                      # (n, i, j, a, b, co)
    y = jnp.transpose(y, (0, 5, 1, 3, 2, 4))                  # (n, co, i, a, j, b)
    return y.reshape(N, Cout, 2 * H, 2 * W)


def _ref_conv_transpose(x, w, b):
    """Pure-numpy reference for ConvTranspose2d(k=4, s=2, p=1), NCHW."""
    N, Cin, H, W = x.shape
    Cout = w.shape[1]
    full = np.zeros((N, Cout, 2 * H + 2, 2 * W + 2), dtype=np.float64)
    for ih in range(H):
        for iw in range(W):
            full[:, :, 2 * ih:2 * ih + 4, 2 * iw:2 * iw + 4] += np.einsum(
                'nc,cokl->nokl', x[:, :, ih, iw], w)
    return (full[:, :, 1:-1, 1:-1] + b[None, :, None, None]).astype(np.float32)


if __name__ == "__main__":
    # Small, module-consistent shapes: Upsample(dim=16) on a (2, 16, 8, 8) map.
    N, dim, H, W = 2, 16, 8, 8

    key = jax.random.PRNGKey(0)
    kx, kw, kb = jax.random.split(key, 3)

    # Deterministic parameter init (PyTorch-style uniform bound 1/sqrt(fan)).
    fan = dim * 4 * 4
    bound = 1.0 / np.sqrt(fan)
    weight = jax.random.uniform(kw, (dim, dim, 4, 4), jnp.float32, -bound, bound)
    bias = jax.random.uniform(kb, (dim,), jnp.float32, -bound, bound)
    x = jax.random.normal(kx, (N, dim, H, W), jnp.float32)

    y = upsample(x, weight, bias)
    y = jax.block_until_ready(y)
    assert y.shape == (N, dim, 2 * H, 2 * W)

    y_ref = _ref_conv_transpose(np.asarray(x, np.float64),
                                np.asarray(weight, np.float64),
                                np.asarray(bias, np.float64))
    np.testing.assert_allclose(np.asarray(y), y_ref, rtol=1e-5, atol=1e-5)

    print("KERNEL_OK")
</pallas_src>

<mosaic_0001>
module attributes {stable_mosaic.version = 11 : i64} {
  func.func @_upsample_kernel(%arg0: i32, %arg1: memref<2x8x8x16xf32, #tpu.memory_space<vmem>>, %arg2: memref<144x64xf32, #tpu.memory_space<vmem>>, %arg3: memref<1x64xf32, #tpu.memory_space<vmem>>, %arg4: memref<2x8x8x64xf32, #tpu.memory_space<vmem>>, %arg5: memref<2x8x8x144xf32, #tpu.memory_space<vmem>>) attributes {dimension_semantics = [#tpu.dimension_semantics<parallel>], iteration_bounds = array<i64: 1>, scalar_prefetch = 0 : i64, scratch_operands = 1 : i64, tpu.core_type = #tpu.core_type<tc>, window_params = [{transform_indices = @transform_0, window_bounds = array<i64: 2, 8, 8, 16>}, {pipeline_mode = #tpu.pipeline_mode<synchronous>, transform_indices = @transform_1, window_bounds = array<i64: 144, 64>}, {pipeline_mode = #tpu.pipeline_mode<synchronous>, transform_indices = @transform_2, window_bounds = array<i64: 1, 64>}, {transform_indices = @transform_3, window_bounds = array<i64: 2, 8, 8, 64>}]} {
    %cst = arith.constant 0.000000e+00 : f32
    %0 = vector.broadcast %cst : f32 to vector<2x8x8x144xf32>
    %c0 = arith.constant 0 : index
    %c0_0 = arith.constant 0 : index
    %c0_1 = arith.constant 0 : index
    %c0_2 = arith.constant 0 : index
    %1 = vector.load %arg5[%c0, %c0_0, %c0_1, %c0_2] : memref<2x8x8x144xf32, #tpu.memory_space<vmem>>, vector<2x8x8x144xf32>
    tpu.vector_store %arg5[%c0, %c0_0, %c0_1, %c0_2], %0 {strides = array<i32>} : memref<2x8x8x144xf32, #tpu.memory_space<vmem>>, vector<2x8x8x144xf32>,
    %c0_3 = arith.constant 0 : index
    %c0_4 = arith.constant 0 : index
    %c0_5 = arith.constant 0 : index
    %c0_6 = arith.constant 0 : index
    %2 = vector.load %arg1[%c0_3, %c0_4, %c0_5, %c0_6] : memref<2x8x8x16xf32, #tpu.memory_space<vmem>>, vector<2x8x8x16xf32>
    %3 = vector.extract_strided_slice %2 {offsets = [0, 0, 0, 0], sizes = [2, 7, 7, 16], strides = [1, 1, 1, 1]} : vector<2x8x8x16xf32> to vector<2x7x7x16xf32>
    %c0_7 = arith.constant 0 : index
    %c1 = arith.constant 1 : index
    %c1_8 = arith.constant 1 : index
    %c0_9 = arith.constant 0 : index
    %4 = vector.load %arg5[%c0_7, %c1, %c1_8, %c0_9] : memref<2x8x8x144xf32, #tpu.memory_space<vmem>>, vector<2x7x7x16xf32>
    tpu.vector_store %arg5[%c0_7, %c1, %c1_8, %c0_9], %3 {strides = array<i32>} : memref<2x8x8x144xf32, #tpu.memory_space<vmem>>, vector<2x7x7x16xf32>,
    %5 = vector.extract_strided_slice %2 {offsets = [0, 0, 0, 0], sizes = [2, 7, 8, 16], strides = [1, 1, 1, 1]} : vector<2x8x8x16xf32> to vector<2x7x8x16xf32>
    %c0_10 = arith.constant 0 : index
    %c1_11 = arith.constant 1 : index
    %c0_12 = arith.constant 0 : index
    %c16 = arith.constant 16 : index
    %6 = vector.load %arg5[%c0_10, %c1_11, %c0_12, %c16] : memref<2x8x8x144xf32, #tpu.memory_space<vmem>>, vector<2x7x8x16xf32>
    tpu.vector_store %arg5[%c0_10, %c1_11, %c0_12, %c16], %5 {strides = array<i32>} : memref<2x8x8x144xf32, #tpu.memory_space<vmem>>, vector<2x7x8x16xf32>,
    %7 = vector.extract_strided_slice %2 {offsets = [0, 0, 1, 0], sizes = [2, 7, 7, 16], strides = [1, 1, 1, 1]} : vector<2x8x8x16xf32> to vector<2x7x7x16xf32>
    %c0_13 = arith.constant 0 : index
    %c1_14 = arith.constant 1 : index
    %c0_15 = arith.constant 0 : index
    %c32 = arith.constant 32 : index
    %8 = vector.load %arg5[%c0_13, %c1_14, %c0_15, %c32] : memref<2x8x8x144xf32, #tpu.memory_space<vmem>>, vector<2x7x7x16xf32>
    tpu.vector_store %arg5[%c0_13, %c1_14, %c0_15, %c32], %7 {strides = array<i32>} : memref<2x8x8x144xf32, #tpu.memory_space<vmem>>, vector<2x7x7x16xf32>,
    %9 = vector.extract_strided_slice %2 {offsets = [0, 0, 0, 0], sizes = [2, 8, 7, 16], strides = [1, 1, 1, 1]} : vector<2x8x8x16xf32> to vector<2x8x7x16xf32>
    %c0_16 = arith.constant 0 : index
    %c0_17 = arith.constant 0 : index
    %c1_18 = arith.constant 1 : index
    %c48 = arith.constant 48 : index
    %10 = vector.load %arg5[%c0_16, %c0_17, %c1_18, %c48] : memref<2x8x8x144xf32, #tpu.memory_space<vmem>>, vector<2x8x7x16xf32>
    tpu.vector_store %arg5[%c0_16, %c0_17, %c1_18, %c48], %9 {strides = array<i32>} : memref<2x8x8x144xf32, #tpu.memory_space<vmem>>, vector<2x8x7x16xf32>,
    %c0_19 = arith.constant 0 : index
    %c0_20 = arith.constant 0 : index
    %c0_21 = arith.constant 0 : index
    %c64 = arith.constant 64 : index
    %11 = vector.load %arg5[%c0_19, %c0_20, %c0_21, %c64] : memref<2x8x8x144xf32, #tpu.memory_space<vmem>>, vector<2x8x8x16xf32>
    tpu.vector_store %arg5[%c0_19, %c0_20, %c0_21, %c64], %2 {strides = array<i32>} : memref<2x8x8x144xf32, #tpu.memory_space<vmem>>, vector<2x8x8x16xf32>,
    %12 = vector.extract_strided_slice %2 {offsets = [0, 0, 1, 0], sizes = [2, 8, 7, 16], strides = [1, 1, 1, 1]} : vector<2x8x8x16xf32> to vector<2x8x7x16xf32>
    %c0_22 = arith.constant 0 : index
    %c0_23 = arith.constant 0 : index
    %c0_24 = arith.constant 0 : index
    %c80 = arith.constant 80 : index
    %13 = vector.load %arg5[%c0_22, %c0_23, %c0_24, %c80] : memref<2x8x8x144xf32, #tpu.memory_space<vmem>>, vector<2x8x7x16xf32>
    tpu.vector_store %arg5[%c0_22, %c0_23, %c0_24, %c80], %12 {strides = array<i32>} : memref<2x8x8x144xf32, #tpu.memory_space<vmem>>, vector<2x8x7x16xf32>,
    %14 = vector.extract_strided_slice %2 {offsets = [0, 1, 0, 0], sizes = [2, 7, 7, 16], strides = [1, 1, 1, 1]} : vector<2x8x8x16xf32> to vector<2x7x7x16xf32>
    %c0_25 = arith.constant 0 : index
    %c0_26 = arith.constant 0 : index
    %c1_27 = arith.constant 1 : index
    %c96 = arith.constant 96 : index
    %15 = vector.load %arg5[%c0_25, %c0_26, %c1_27, %c96] : memref<2x8x8x144xf32, #tpu.memory_space<vmem>>, vector<2x7x7x16xf32>
    tpu.vector_store %arg5[%c0_25, %c0_26, %c1_27, %c96], %14 {strides = array<i32>} : memref<2x8x8x144xf32, #tpu.memory_space<vmem>>, vector<2x7x7x16xf32>,
    %16 = vector.extract_strided_slice %2 {offsets = [0, 1, 0, 0], sizes = [2, 7, 8, 16], strides = [1, 1, 1, 1]} : vector<2x8x8x16xf32> to vector<2x7x8x16xf32>
    %c0_28 = arith.constant 0 : index
    %c0_29 = arith.constant 0 : index
    %c0_30 = arith.constant 0 : index
    %c112 = arith.constant 112 : index
    %17 = vector.load %arg5[%c0_28, %c0_29, %c0_30, %c112] : memref<2x8x8x144xf32, #tpu.memory_space<vmem>>, vector<2x7x8x16xf32>
    tpu.vector_store %arg5[%c0_28, %c0_29, %c0_30, %c112], %16 {strides = array<i32>} : memref<2x8x8x144xf32, #tpu.memory_space<vmem>>, vector<2x7x8x16xf32>,
    %18 = vector.extract_strided_slice %2 {offsets = [0, 1, 1, 0], sizes = [2, 7, 7, 16], strides = [1, 1, 1, 1]} : vector<2x8x8x16xf32> to vector<2x7x7x16xf32>
    %c0_31 = arith.constant 0 : index
    %c0_32 = arith.constant 0 : index
    %c0_33 = arith.constant 0 : index
    %c128 = arith.constant 128 : index
    %19 = vector.load %arg5[%c0_31, %c0_32, %c0_33, %c128] : memref<2x8x8x144xf32, #tpu.memory_space<vmem>>, vector<2x7x7x16xf32>
    tpu.vector_store %arg5[%c0_31, %c0_32, %c0_33, %c128], %18 {strides = array<i32>} : memref<2x8x8x144xf32, #tpu.memory_space<vmem>>, vector<2x7x7x16xf32>,
    %c0_34 = arith.constant 0 : index
    %c0_35 = arith.constant 0 : index
    %c0_36 = arith.constant 0 : index
    %c0_37 = arith.constant 0 : index
    %20 = vector.load %arg5[%c0_34, %c0_35, %c0_36, %c0_37] : memref<2x8x8x144xf32, #tpu.memory_space<vmem>>, vector<2x8x8x144xf32>
    %21 = vector.shape_cast %20 : vector<2x8x8x144xf32> to vector<128x144xf32>
    %c0_38 = arith.constant 0 : index
    %c0_39 = arith.constant 0 : index
    %22 = vector.load %arg2[%c0_38, %c0_39] : memref<144x64xf32, #tpu.memory_space<vmem>>, vector<144x64xf32>
    %cst_40 = arith.constant dense<0.000000e+00> : vector<128x64xf32>
    %23 = tpu.matmul %21, %22, %cst_40 {dimension_numbers = #tpu.dot_dimension_numbers<[1], [0], [0], [1], [0, 0, 1, 1], [], []>} : vector<128x144xf32>, vector<144x64xf32>, vector<128x64xf32> -> vector<128x64xf32>
    %c0_41 = arith.constant 0 : index
    %c0_42 = arith.constant 0 : index
    %24 = vector.load %arg3[%c0_41, %c0_42] : memref<1x64xf32, #tpu.memory_space<vmem>>, vector<1x64xf32>
    %25 = vector.broadcast %24 : vector<1x64xf32> to vector<128x64xf32>
    %26 = arith.addf %23, %25 : vector<128x64xf32>
    %27 = vector.shape_cast %26 : vector<128x64xf32> to vector<2x8x8x64xf32>
    %c0_43 = arith.constant 0 : index
    %c0_44 = arith.constant 0 : index
    %c0_45 = arith.constant 0 : index
    %c0_46 = arith.constant 0 : index
    %28 = vector.load %arg4[%c0_43, %c0_44, %c0_45, %c0_46] : memref<2x8x8x64xf32, #tpu.memory_space<vmem>>, vector<2x8x8x64xf32>
    tpu.vector_store %arg4[%c0_43, %c0_44, %c0_45, %c0_46], %27 {strides = array<i32>} : memref<2x8x8x64xf32, #tpu.memory_space<vmem>>, vector<2x8x8x64xf32>,
    return
  }
  func.func @transform_0(%arg0: i32) -> (i32, i32, i32, i32) {
    %c0_i32 = arith.constant 0 : i32
    %c0_i32_0 = arith.constant 0 : i32
    %c0_i32_1 = arith.constant 0 : i32
    %c0_i32_2 = arith.constant 0 : i32
    return %arg0, %c0_i32, %c0_i32_0, %c0_i32_1 : i32, i32, i32, i32
  }
  func.func @transform_1(%arg0: i32) -> (i32, i32) {
    %c0_i32 = arith.constant 0 : i32
    %c0_i32_0 = arith.constant 0 : i32
    %c0_i32_1 = arith.constant 0 : i32
    return %c0_i32, %c0_i32_0 : i32, i32
  }
  func.func @transform_2(%arg0: i32) -> (i32, i32) {
    %c0_i32 = arith.constant 0 : i32
    %c0_i32_0 = arith.constant 0 : i32
    %c0_i32_1 = arith.constant 0 : i32
    return %c0_i32, %c0_i32_0 : i32, i32
  }
  func.func @transform_3(%arg0: i32) -> (i32, i32, i32, i32) {
    %c0_i32 = arith.constant 0 : i32
    %c0_i32_0 = arith.constant 0 : i32
    %c0_i32_1 = arith.constant 0 : i32
    %c0_i32_2 = arith.constant 0 : i32
    return %arg0, %c0_i32, %c0_i32_0, %c0_i32_1 : i32, i32, i32, i32
  }
}

</mosaic_0001>

<llo_original>
// kernel: tpu_custom_call.1
$region0: #{tpu_custom_call.1}
  #allocation0 [shape = 'u32[]', space=smem, size = 0x4, offset = 0x4, fixed_abs, tag = 'smem constant byte address 0x4 - core index']
  #allocation1 [shape = 'u32[144,128]{1,0:T(1,128)}', space=vmem, size = 0x12000, scoped, tag = 'internal scratch']
  #allocation2 [shape = 'f32[2,8,8,144]{3,2,1,0:T(8,128)}', space=vmem, size = 0x20000, scoped, tag = 'scratch operand']
  %s0 = inlined_call_operand.vmem [shape: f32[2,8,8,16], index: 0, kind: input, shape index: {}]
  %s1 = inlined_call_operand.vmem [shape: f32[144,64], index: 1, kind: input, shape index: {}]
  %s2 = inlined_call_operand.vmem [shape: f32[1,64], index: 2, kind: input, shape index: {}]
  %s3 = inlined_call_operand.hbm [shape: f32[2,8,8,64], index: 3, kind: output, shape index: {}]
  %s4 = sld [smem:[#allocation0]]
  $region22: #{tpu_custom_call.1} parent=0
    _
  %s6 = ssub.s32 1, %s4
  %s7 = scalar_select 0, %s6, %s4
  $region1: #{tpu_custom_call.1} parent=0
    #allocation3 [shape = 'u8[65536]{0}', space=vmem, size = 0x10000, scoped, tag = 'output window, operand 0, single buffered']
    #allocation4 [shape = 's32[1]{0}', space=sflag, size = 0x4, scoped, tag = 'scoped memory for tpu_custom_call.1']
    %8 = vsyncpa [#allocation4], 0
    // Predicated region
    $region2: #{tpu_custom_call.1} parent=1 // pred_check
      _
    $region3: #{tpu_custom_call.1} parent=1 // pred_check_branch
      %10 = sbr.rel (0) target = $region5
    $region4: #{tpu_custom_call.1} parent=1 // pred_region
      _
    $region5: #{tpu_custom_call.1} parent=1 // pred_fallthru
      _
    // Predicated region
    $region6: #{tpu_custom_call.1} parent=1 // pred_check
      _
    $region7: #{tpu_custom_call.1} parent=1 // pred_check_branch
      %12 = sbr.rel (0) target = $region9
    $region8: #{tpu_custom_call.1} parent=1 // pred_region
      _
    $region9: #{tpu_custom_call.1} parent=1 // pred_fallthru
      _
    // Predicated region
    $region10: #{tpu_custom_call.1} parent=1 // pred_check
      _
    $region11: #{tpu_custom_call.1} parent=1 // pred_check_branch
      %14 = sbr.rel (0) target = $region13
    $region12: #{tpu_custom_call.1} parent=1 // pred_region
      _
    $region13: #{tpu_custom_call.1} parent=1 // pred_fallthru
      _
    %15 = vst [vmem:[#allocation2] sm:$0xff] 0.0
    %vm16 = vcmask 130048
    %17 = vst.msk [vmem:[#allocation2 + $0x8] sm:$0xff] %vm16, 0.0
    %18 = vst [vmem:[#allocation2 + $0x10] sm:$0xff] 0.0
    %19 = vst.msk [vmem:[#allocation2 + $0x18] sm:$0xff] %vm16, 0.0
    %20 = vst [vmem:[#allocation2 + $0x20] sm:$0xff] 0.0
    %21 = vst.msk [vmem:[#allocation2 + $0x28] sm:$0xff] %vm16, 0.0
    %22 = vst [vmem:[#allocation2 + $0x30] sm:$0xff] 0.0
    %23 = vst.msk [vmem:[#allocation2 + $0x38] sm:$0xff] %vm16, 0.0
    %24 = vst [vmem:[#allocation2 + $0x40] sm:$0xff] 0.0
    %25 = vst.msk [vmem:[#allocation2 + $0x48] sm:$0xff] %vm16, 0.0
    %26 = vst [vmem:[#allocation2 + $0x50] sm:$0xff] 0.0
    %27 = vst.msk [vmem:[#allocation2 + $0x58] sm:$0xff] %vm16, 0.0
    %28 = vst [vmem:[#allocation2 + $0x60] sm:$0xff] 0.0
    %29 = vst.msk [vmem:[#allocation2 + $0x68] sm:$0xff] %vm16, 0.0
    %30 = vst [vmem:[#allocation2 + $0x70] sm:$0xff] 0.0
    %31 = vst.msk [vmem:[#allocation2 + $0x78] sm:$0xff] %vm16, 0.0
    %32 = vst [vmem:[#allocation2 + $0x80] sm:$0xff] 0.0
    %33 = vst.msk [vmem:[#allocation2 + $0x88] sm:$0xff] %vm16, 0.0
    %34 = vst [vmem:[#allocation2 + $0x90] sm:$0xff] 0.0
    %35 = vst.msk [vmem:[#allocation2 + $0x98] sm:$0xff] %vm16, 0.0
    %36 = vst [vmem:[#allocation2 + $0xa0] sm:$0xff] 0.0
    %37 = vst.msk [vmem:[#allocation2 + $0xa8] sm:$0xff] %vm16, 0.0
    %38 = vst [vmem:[#allocation2 + $0xb0] sm:$0xff] 0.0
    %39 = vst.msk [vmem:[#allocation2 + $0xb8] sm:$0xff] %vm16, 0.0
    %40 = vst [vmem:[#allocation2 + $0xc0] sm:$0xff] 0.0
    %41 = vst.msk [vmem:[#allocation2 + $0xc8] sm:$0xff] %vm16, 0.0
    %42 = vst [vmem:[#allocation2 + $0xd0] sm:$0xff] 0.0
    %43 = vst.msk [vmem:[#allocation2 + $0xd8] sm:$0xff] %vm16, 0.0
    %44 = vst [vmem:[#allocation2 + $0xe0] sm:$0xff] 0.0
    %45 = vst.msk [vmem:[#allocation2 + $0xe8] sm:$0xff] %vm16, 0.0
    %46 = vst [vmem:[#allocation2 + $0xf0] sm:$0xff] 0.0
    %47 = vst.msk [vmem:[#allocation2 + $0xf8] sm:$0xff] %vm16, 0.0
    %v48 = vld [vmem:[%s0] sm:$0xff]
    %v49 = vld [vmem:[%s0 + $0x8] sm:$0xff]
    %v50 = vld [vmem:[%s0 + $0x10] sm:$0xff]
    %v51 = vld [vmem:[%s0 + $0x18] sm:$0xff]
    %v52 = vld [vmem:[%s0 + $0x20] sm:$0xff]
    %v53 = vld [vmem:[%s0 + $0x28] sm:$0xff]
    %v54 = vld [vmem:[%s0 + $0x30] sm:$0xff]
    %v55 = vld [vmem:[%s0 + $0x38] sm:$0xff]
    %v56 = vld [vmem:[%s0 + $0x40] sm:$0xff]
    %v57 = vld [vmem:[%s0 + $0x48] sm:$0xff]
    %v58 = vld [vmem:[%s0 + $0x50] sm:$0xff]
    %v59 = vld [vmem:[%s0 + $0x58] sm:$0xff]
    %v60 = vld [vmem:[%s0 + $0x60] sm:$0xff]
    %v61 = vld [vmem:[%s0 + $0x68] sm:$0xff]
    %v62 = vld [vmem:[%s0 + $0x70] sm:$0xff]
    %v63 = vld [vmem:[%s0 + $0x78] sm:$0xff]
    %v78 = vrot.slane %v48, 7
    %v79 = vrot.slane %v49, 7
    %v80 = vrot.slane %v50, 7
    %v81 = vrot.slane %v51, 7
    %v82 = vrot.slane %v52, 7
    %v83 = vrot.slane %v53, 7
    %v84 = vrot.slane %v54, 7
    %v85 = vrot.slane %v56, 7
    %v86 = vrot.slane %v57, 7
    %v87 = vrot.slane %v58, 7
    %v88 = vrot.slane %v59, 7
    %v89 = vrot.slane %v60, 7
    %v90 = vrot.slane %v61, 7
    %v91 = vrot.slane %v62, 7
    %s106 = scalar_lea.vmem [#allocation2], 16
    %vm107 = vcmask 130049
    %108 = vst.msk [vmem:[%s106] sm:$0xfe] %vm107, %v78
    %109 = vst.msk [vmem:[%s106 + $0x10] sm:$0xfe] %vm107, %v79
    %110 = vst.msk [vmem:[%s106 + $0x20] sm:$0xfe] %vm107, %v80
    %111 = vst.msk [vmem:[%s106 + $0x30] sm:$0xfe] %vm107, %v81
    %112 = vst.msk [vmem:[%s106 + $0x40] sm:$0xfe] %vm107, %v82
    %113 = vst.msk [vmem:[%s106 + $0x50] sm:$0xfe] %vm107, %v83
    %114 = vst.msk [vmem:[%s106 + $0x60] sm:$0xfe] %vm107, %v84
    %115 = vst.msk [vmem:[%s106 + $0x80] sm:$0xfe] %vm107, %v85
    %116 = vst.msk [vmem:[%s106 + $0x90] sm:$0xfe] %vm107, %v86
    %117 = vst.msk [vmem:[%s106 + $0xa0] sm:$0xfe] %vm107, %v87
    %118 = vst.msk [vmem:[%s106 + $0xb0] sm:$0xfe] %vm107, %v88
    %119 = vst.msk [vmem:[%s106 + $0xc0] sm:$0xfe] %vm107, %v89
    %120 = vst.msk [vmem:[%s106 + $0xd0] sm:$0xfe] %vm107, %v90
    %121 = vst.msk [vmem:[%s106 + $0xe0] sm:$0xfe] %vm107, %v91
    %122 = vrot.lane.b32.xlu0 %v48, 16
    %v123 = vpop.permute.xlu0 %122
    %124 = vrot.lane.b32.xlu0 %v49, 16
    %v125 = vpop.permute.xlu0 %124
    %126 = vrot.lane.b32.xlu0 %v50, 16
    %v127 = vpop.permute.xlu0 %126
    %128 = vrot.lane.b32.xlu0 %v51, 16
    %v129 = vpop.permute.xlu0 %128
    %130 = vrot.lane.b32.xlu0 %v52, 16
    %v131 = vpop.permute.xlu0 %130
    %132 = vrot.lane.b32.xlu0 %v53, 16
    %v133 = vpop.permute.xlu0 %132
    %134 = vrot.lane.b32.xlu0 %v54, 16
    %v135 = vpop.permute.xlu0 %134
    %136 = vrot.lane.b32.xlu0 %v56, 16
    %v137 = vpop.permute.xlu0 %136
    %138 = vrot.lane.b32.xlu0 %v57, 16
    %v139 = vpop.permute.xlu0 %138
    %140 = vrot.lane.b32.xlu0 %v58, 16
    %v141 = vpop.permute.xlu0 %140
    %142 = vrot.lane.b32.xlu0 %v59, 16
    %v143 = vpop.permute.xlu0 %142
    %144 = vrot.lane.b32.xlu0 %v60, 16
    %v145 = vpop.permute.xlu0 %144
    %146 = vrot.lane.b32.xlu0 %v61, 16
    %v147 = vpop.permute.xlu0 %146
    %148 = vrot.lane.b32.xlu0 %v62, 16
    %v149 = vpop.permute.xlu0 %148
    %vm164 = vcmask 261248
    %165 = vst.msk [vmem:[%s106] sm:$0xff] %vm164, %v123
    %166 = vst.msk [vmem:[%s106 + $0x10] sm:$0xff] %vm164, %v125
    %167 = vst.msk [vmem:[%s106 + $0x20] sm:$0xff] %vm164, %v127
    %168 = vst.msk [vmem:[%s106 + $0x30] sm:$0xff] %vm164, %v129
    %169 = vst.msk [vmem:[%s106 + $0x40] sm:$0xff] %vm164, %v131
    %170 = vst.msk [vmem:[%s106 + $0x50] sm:$0xff] %vm164, %v133
    %171 = vst.msk [vmem:[%s106 + $0x60] sm:$0xff] %vm164, %v135
    %172 = vst.msk [vmem:[%s106 + $0x80] sm:$0xff] %vm164, %v137
    %173 = vst.msk [vmem:[%s106 + $0x90] sm:$0xff] %vm164, %v139
    %174 = vst.msk [vmem:[%s106 + $0xa0] sm:$0xff] %vm164, %v141
    %175 = vst.msk [vmem:[%s106 + $0xb0] sm:$0xff] %vm164, %v143
    %176 = vst.msk [vmem:[%s106 + $0xc0] sm:$0xff] %vm164, %v145
    %177 = vst.msk [vmem:[%s106 + $0xd0] sm:$0xff] %vm164, %v147
    %178 = vst.msk [vmem:[%s106 + $0xe0] sm:$0xff] %vm164, %v149
    %v179 = vrot.slane %v48, 1
    %v180 = vrot.slane %v49, 1
    %v181 = vrot.slane %v50, 1
    %v182 = vrot.slane %v51, 1
    %v183 = vrot.slane %v52, 1
    %v184 = vrot.slane %v53, 1
    %v185 = vrot.slane %v54, 1
    %v186 = vrot.slane %v56, 1
    %v187 = vrot.slane %v57, 1
    %v188 = vrot.slane %v58, 1
    %v189 = vrot.slane %v59, 1
    %v190 = vrot.slane %v60, 1
    %v191 = vrot.slane %v61, 1
    %v192 = vrot.slane %v62, 1
    %193 = vrot.lane.b32.xlu0 %v179, 32
    %v194 = vpop.permute.xlu0 %193
    %195 = vrot.lane.b32.xlu0 %v180, 32
    %v196 = vpop.permute.xlu0 %195
    %197 = vrot.lane.b32.xlu0 %v181, 32
    %v198 = vpop.permute.xlu0 %197
    %199 = vrot.lane.b32.xlu0 %v182, 32
    %v200 = vpop.permute.xlu0 %199
    %201 = vrot.lane.b32.xlu0 %v183, 32
    %v202 = vpop.permute.xlu0 %201
    %203 = vrot.lane.b32.xlu0 %v184, 32
    %v204 = vpop.permute.xlu0 %203
    %205 = vrot.lane.b32.xlu0 %v185, 32
    %v206 = vpop.permute.xlu0 %205
    %207 = vrot.lane.b32.xlu0 %v186, 32
    %v208 = vpop.permute.xlu0 %207
    %209 = vrot.lane.b32.xlu0 %v187, 32
    %v210 = vpop.permute.xlu0 %209
    %211 = vrot.lane.b32.xlu0 %v188, 32
    %v212 = vpop.permute.xlu0 %211
    %213 = vrot.lane.b32.xlu0 %v189, 32
    %v214 = vpop.permute.xlu0 %213
    %215 = vrot.lane.b32.xlu0 %v190, 32
    %v216 = vpop.permute.xlu0 %215
    %217 = vrot.lane.b32.xlu0 %v191, 32
    %v218 = vpop.permute.xlu0 %217
    %219 = vrot.lane.b32.xlu0 %v192, 32
    %v220 = vpop.permute.xlu0 %219
    %vm235 = vcmask 391424
    %236 = vst.msk [vmem:[%s106] sm:$0x7f] %vm235, %v194
    %237 = vst.msk [vmem:[%s106 + $0x10] sm:$0x7f] %vm235, %v196
    %238 = vst.msk [vmem:[%s106 + $0x20] sm:$0x7f] %vm235, %v198
    %239 = vst.msk [vmem:[%s106 + $0x30] sm:$0x7f] %vm235, %v200
    %240 = vst.msk [vmem:[%s106 + $0x40] sm:$0x7f] %vm235, %v202
    %241 = vst.msk [vmem:[%s106 + $0x50] sm:$0x7f] %vm235, %v204
    %242 = vst.msk [vmem:[%s106 + $0x60] sm:$0x7f] %vm235, %v206
    %243 = vst.msk [vmem:[%s106 + $0x80] sm:$0x7f] %vm235, %v208
    %244 = vst.msk [vmem:[%s106 + $0x90] sm:$0x7f] %vm235, %v210
    %245 = vst.msk [vmem:[%s106 + $0xa0] sm:$0x7f] %vm235, %v212
    %246 = vst.msk [vmem:[%s106 + $0xb0] sm:$0x7f] %vm235, %v214
    %247 = vst.msk [vmem:[%s106 + $0xc0] sm:$0x7f] %vm235, %v216
    %248 = vst.msk [vmem:[%s106 + $0xd0] sm:$0x7f] %vm235, %v218
    %249 = vst.msk [vmem:[%s106 + $0xe0] sm:$0x7f] %vm235, %v220
    %v252 = vrot.slane %v55, 7
    %v253 = vrot.slane %v63, 7
    %254 = vrot.lane.b32.xlu0 %v78, 48
    %v255 = vpop.permute.xlu0 %254
    %256 = vrot.lane.b32.xlu0 %v79, 48
    %v257 = vpop.permute.xlu0 %256
    %258 = vrot.lane.b32.xlu0 %v80, 48
    %v259 = vpop.permute.xlu0 %258
    %260 = vrot.lane.b32.xlu0 %v81, 48
    %v261 = vpop.permute.xlu0 %260
    %262 = vrot.lane.b32.xlu0 %v82, 48
    %v263 = vpop.permute.xlu0 %262
    %264 = vrot.lane.b32.xlu0 %v83, 48
    %v265 = vpop.permute.xlu0 %264
    %266 = vrot.lane.b32.xlu0 %v84, 48
    %v267 = vpop.permute.xlu0 %266
    %268 = vrot.lane.b32.xlu0 %v252, 48
    %v269 = vpop.permute.xlu0 %268
    %270 = vrot.lane.b32.xlu0 %v85, 48
    %v271 = vpop.permute.xlu0 %270
    %272 = vrot.lane.b32.xlu0 %v86, 48
    %v273 = vpop.permute.xlu0 %272
    %274 = vrot.lane.b32.xlu0 %v87, 48
    %v275 = vpop.permute.xlu0 %274
    %276 = vrot.lane.b32.xlu0 %v88, 48
    %v277 = vpop.permute.xlu0 %276
    %278 = vrot.lane.b32.xlu0 %v89, 48
    %v279 = vpop.permute.xlu0 %278
    %280 = vrot.lane.b32.xlu0 %v90, 48
    %v281 = vpop.permute.xlu0 %280
    %282 = vrot.lane.b32.xlu0 %v91, 48
    %v283 = vpop.permute.xlu0 %282
    %284 = vrot.lane.b32.xlu0 %v253, 48
    %v285 = vpop.permute.xlu0 %284
    %vm302 = vcmask 523649
    %303 = vst.msk [vmem:[#allocation2] sm:$0xfe] %vm302, %v255
    %304 = vst.msk [vmem:[#allocation2 + $0x10] sm:$0xfe] %vm302, %v257
    %305 = vst.msk [vmem:[#allocation2 + $0x20] sm:$0xfe] %vm302, %v259
    %306 = vst.msk [vmem:[#allocation2 + $0x30] sm:$0xfe] %vm302, %v261
    %307 = vst.msk [vmem:[#allocation2 + $0x40] sm:$0xfe] %vm302, %v263
    %308 = vst.msk [vmem:[#allocation2 + $0x50] sm:$0xfe] %vm302, %v265
    %309 = vst.msk [vmem:[#allocation2 + $0x60] sm:$0xfe] %vm302, %v267
    %310 = vst.msk [vmem:[#allocation2 + $0x70] sm:$0xfe] %vm302, %v269
    %311 = vst.msk [vmem:[#allocation2 + $0x80] sm:$0xfe] %vm302, %v271
    %312 = vst.msk [vmem:[#allocation2 + $0x90] sm:$0xfe] %vm302, %v273
    %313 = vst.msk [vmem:[#allocation2 + $0xa0] sm:$0xfe] %vm302, %v275
    %314 = vst.msk [vmem:[#allocation2 + $0xb0] sm:$0xfe] %vm302, %v277
    %315 = vst.msk [vmem:[#allocation2 + $0xc0] sm:$0xfe] %vm302, %v279
    %316 = vst.msk [vmem:[#allocation2 + $0xd0] sm:$0xfe] %vm302, %v281
    %317 = vst.msk [vmem:[#allocation2 + $0xe0] sm:$0xfe] %vm302, %v283
    %318 = vst.msk [vmem:[#allocation2 + $0xf0] sm:$0xfe] %vm302, %v285
    %319 = vrot.lane.b32.xlu0 %v48, 64
    %v320 = vpop.permute.xlu0 %319
    %321 = vrot.lane.b32.xlu0 %v49, 64
    %v322 = vpop.permute.xlu0 %321
    %323 = vrot.lane.b32.xlu0 %v50, 64
    %v324 = vpop.permute.xlu0 %323
    %325 = vrot.lane.b32.xlu0 %v51, 64
    %v326 = vpop.permute.xlu0 %325
    %327 = vrot.lane.b32.xlu0 %v52, 64
    %v328 = vpop.permute.xlu0 %327
    %329 = vrot.lane.b32.xlu0 %v53, 64
    %v330 = vpop.permute.xlu0 %329
    %331 = vrot.lane.b32.xlu0 %v54, 64
    %v332 = vpop.permute.xlu0 %331
    %333 = vrot.lane.b32.xlu0 %v55, 64
    %v334 = vpop.permute.xlu0 %333
    %335 = vrot.lane.b32.xlu0 %v56, 64
    %v336 = vpop.permute.xlu0 %335
    %337 = vrot.lane.b32.xlu0 %v57, 64
    %v338 = vpop.permute.xlu0 %337
    %339 = vrot.lane.b32.xlu0 %v58, 64
    %v340 = vpop.permute.xlu0 %339
    %341 = vrot.lane.b32.xlu0 %v59, 64
    %v342 = vpop.permute.xlu0 %341
    %343 = vrot.lane.b32.xlu0 %v60, 64
    %v344 = vpop.permute.xlu0 %343
    %345 = vrot.lane.b32.xlu0 %v61, 64
    %v346 = vpop.permute.xlu0 %345
    %347 = vrot.lane.b32.xlu0 %v62, 64
    %v348 = vpop.permute.xlu0 %347
    %349 = vrot.lane.b32.xlu0 %v63, 64
    %v350 = vpop.permute.xlu0 %349
    %vm367 = vcmask 654848
    %368 = vst.msk [vmem:[#allocation2] sm:$0xff] %vm367, %v320
    %369 = vst.msk [vmem:[#allocation2 + $0x10] sm:$0xff] %vm367, %v322
    %370 = vst.msk [vmem:[#allocation2 + $0x20] sm:$0xff] %vm367, %v324
    %371 = vst.msk [vmem:[#allocation2 + $0x30] sm:$0xff] %vm367, %v326
    %372 = vst.msk [vmem:[#allocation2 + $0x40] sm:$0xff] %vm367, %v328
    %373 = vst.msk [vmem:[#allocation2 + $0x50] sm:$0xff] %vm367, %v330
    %374 = vst.msk [vmem:[#allocation2 + $0x60] sm:$0xff] %vm367, %v332
    %375 = vst.msk [vmem:[#allocation2 + $0x70] sm:$0xff] %vm367, %v334
    %376 = vst.msk [vmem:[#allocation2 + $0x80] sm:$0xff] %vm367, %v336
    %377 = vst.msk [vmem:[#allocation2 + $0x90] sm:$0xff] %vm367, %v338
    %378 = vst.msk [vmem:[#allocation2 + $0xa0] sm:$0xff] %vm367, %v340
    %379 = vst.msk [vmem:[#allocation2 + $0xb0] sm:$0xff] %vm367, %v342
    %380 = vst.msk [vmem:[#allocation2 + $0xc0] sm:$0xff] %vm367, %v344
    %381 = vst.msk [vmem:[#allocation2 + $0xd0] sm:$0xff] %vm367, %v346
    %382 = vst.msk [vmem:[#allocation2 + $0xe0] sm:$0xff] %vm367, %v348
    %383 = vst.msk [vmem:[#allocation2 + $0xf0] sm:$0xff] %vm367, %v350
    %v384 = vrot.slane %v55, 1
    %v385 = vrot.slane %v63, 1
    %386 = vrot.lane.b32.xlu0 %v179, 80
    %v387 = vpop.permute.xlu0 %386
    %388 = vrot.lane.b32.xlu0 %v180, 80
    %v389 = vpop.permute.xlu0 %388
    %390 = vrot.lane.b32.xlu0 %v181, 80
    %v391 = vpop.permute.xlu0 %390
    %392 = vrot.lane.b32.xlu0 %v182, 80
    %v393 = vpop.permute.xlu0 %392
    %394 = vrot.lane.b32.xlu0 %v183, 80
    %v395 = vpop.permute.xlu0 %394
    %396 = vrot.lane.b32.xlu0 %v184, 80
    %v397 = vpop.permute.xlu0 %396
    %398 = vrot.lane.b32.xlu0 %v185, 80
    %v399 = vpop.permute.xlu0 %398
    %400 = vrot.lane.b32.xlu0 %v384, 80
    %v401 = vpop.permute.xlu0 %400
    %402 = vrot.lane.b32.xlu0 %v186, 80
    %v403 = vpop.permute.xlu0 %402
    %404 = vrot.lane.b32.xlu0 %v187, 80
    %v405 = vpop.permute.xlu0 %404
    %406 = vrot.lane.b32.xlu0 %v188, 80
    %v407 = vpop.permute.xlu0 %406
    %408 = vrot.lane.b32.xlu0 %v189, 80
    %v409 = vpop.permute.xlu0 %408
    %410 = vrot.lane.b32.xlu0 %v190, 80
    %v411 = vpop.permute.xlu0 %410
    %412 = vrot.lane.b32.xlu0 %v191, 80
    %v413 = vpop.permute.xlu0 %412
    %414 = vrot.lane.b32.xlu0 %v192, 80
    %v415 = vpop.permute.xlu0 %414
    %416 = vrot.lane.b32.xlu0 %v385, 80
    %v417 = vpop.permute.xlu0 %416
    %vm434 = vcmask 785024
    %435 = vst.msk [vmem:[#allocation2] sm:$0x7f] %vm434, %v387
    %436 = vst.msk [vmem:[#allocation2 + $0x10] sm:$0x7f] %vm434, %v389
    %437 = vst.msk [vmem:[#allocation2 + $0x20] sm:$0x7f] %vm434, %v391
    %438 = vst.msk [vmem:[#allocation2 + $0x30] sm:$0x7f] %vm434, %v393
    %439 = vst.msk [vmem:[#allocation2 + $0x40] sm:$0x7f] %vm434, %v395
    %440 = vst.msk [vmem:[#allocation2 + $0x50] sm:$0x7f] %vm434, %v397
    %441 = vst.msk [vmem:[#allocation2 + $0x60] sm:$0x7f] %vm434, %v399
    %442 = vst.msk [vmem:[#allocation2 + $0x70] sm:$0x7f] %vm434, %v401
    %443 = vst.msk [vmem:[#allocation2 + $0x80] sm:$0x7f] %vm434, %v403
    %444 = vst.msk [vmem:[#allocation2 + $0x90] sm:$0x7f] %vm434, %v405
    %445 = vst.msk [vmem:[#allocation2 + $0xa0] sm:$0x7f] %vm434, %v407
    %446 = vst.msk [vmem:[#allocation2 + $0xb0] sm:$0x7f] %vm434, %v409
    %447 = vst.msk [vmem:[#allocation2 + $0xc0] sm:$0x7f] %vm434, %v411
    %448 = vst.msk [vmem:[#allocation2 + $0xd0] sm:$0x7f] %vm434, %v413
    %449 = vst.msk [vmem:[#allocation2 + $0xe0] sm:$0x7f] %vm434, %v415
    %450 = vst.msk [vmem:[#allocation2 + $0xf0] sm:$0x7f] %vm434, %v417
    %451 = vrot.lane.b32.xlu0 %v79, 96
    %v452 = vpop.permute.xlu0 %451
    %453 = vrot.lane.b32.xlu0 %v80, 96
    %v454 = vpop.permute.xlu0 %453
    %455 = vrot.lane.b32.xlu0 %v81, 96
    %v456 = vpop.permute.xlu0 %455
    %457 = vrot.lane.b32.xlu0 %v82, 96
    %v458 = vpop.permute.xlu0 %457
    %459 = vrot.lane.b32.xlu0 %v83, 96
    %v460 = vpop.permute.xlu0 %459
    %461 = vrot.lane.b32.xlu0 %v84, 96
    %v462 = vpop.permute.xlu0 %461
    %463 = vrot.lane.b32.xlu0 %v252, 96
    %v464 = vpop.permute.xlu0 %463
    %465 = vrot.lane.b32.xlu0 %v86, 96
    %v466 = vpop.permute.xlu0 %465
    %467 = vrot.lane.b32.xlu0 %v87, 96
    %v468 = vpop.permute.xlu0 %467
    %469 = vrot.lane.b32.xlu0 %v88, 96
    %v470 = vpop.permute.xlu0 %469
    %471 = vrot.lane.b32.xlu0 %v89, 96
    %v472 = vpop.permute.xlu0 %471
    %473 = vrot.lane.b32.xlu0 %v90, 96
    %v474 = vpop.permute.xlu0 %473
    %475 = vrot.lane.b32.xlu0 %v91, 96
    %v476 = vpop.permute.xlu0 %475
    %477 = vrot.lane.b32.xlu0 %v253, 96
    %v478 = vpop.permute.xlu0 %477
    %vm493 = vcmask 917249
    %494 = vst.msk [vmem:[#allocation2] sm:$0xfe] %vm493, %v452
    %495 = vst.msk [vmem:[#allocation2 + $0x10] sm:$0xfe] %vm493, %v454
    %496 = vst.msk [vmem:[#allocation2 + $0x20] sm:$0xfe] %vm493, %v456
    %497 = vst.msk [vmem:[#allocation2 + $0x30] sm:$0xfe] %vm493, %v458
    %498 = vst.msk [vmem:[#allocation2 + $0x40] sm:$0xfe] %vm493, %v460
    %499 = vst.msk [vmem:[#allocation2 + $0x50] sm:$0xfe] %vm493, %v462
    %500 = vst.msk [vmem:[#allocation2 + $0x60] sm:$0xfe] %vm493, %v464
    %501 = vst.msk [vmem:[#allocation2 + $0x80] sm:$0xfe] %vm493, %v466
    %502 = vst.msk [vmem:[#allocation2 + $0x90] sm:$0xfe] %vm493, %v468
    %503 = vst.msk [vmem:[#allocation2 + $0xa0] sm:$0xfe] %vm493, %v470
    %504 = vst.msk [vmem:[#allocation2 + $0xb0] sm:$0xfe] %vm493, %v472
    %505 = vst.msk [vmem:[#allocation2 + $0xc0] sm:$0xfe] %vm493, %v474
    %506 = vst.msk [vmem:[#allocation2 + $0xd0] sm:$0xfe] %vm493, %v476
    %507 = vst.msk [vmem:[#allocation2 + $0xe0] sm:$0xfe] %vm493, %v478
    %508 = vrot.lane.b32.xlu0 %v49, 112
    %v509 = vpop.permute.xlu0 %508
    %510 = vrot.lane.b32.xlu0 %v50, 112
    %v511 = vpop.permute.xlu0 %510
    %512 = vrot.lane.b32.xlu0 %v51, 112
    %v513 = vpop.permute.xlu0 %512
    %514 = vrot.lane.b32.xlu0 %v52, 112
    %v515 = vpop.permute.xlu0 %514
    %516 = vrot.lane.b32.xlu0 %v53, 112
    %v517 = vpop.permute.xlu0 %516
    %518 = vrot.lane.b32.xlu0 %v54, 112
    %v519 = vpop.permute.xlu0 %518
    %520 = vrot.lane.b32.xlu0 %v55, 112
    %v521 = vpop.permute.xlu0 %520
    %522 = vrot.lane.b32.xlu0 %v57, 112
    %v523 = vpop.permute.xlu0 %522
    %524 = vrot.lane.b32.xlu0 %v58, 112
    %v525 = vpop.permute.xlu0 %524
    %526 = vrot.lane.b32.xlu0 %v59, 112
    %v527 = vpop.permute.xlu0 %526
    %528 = vrot.lane.b32.xlu0 %v60, 112
    %v529 = vpop.permute.xlu0 %528
    %530 = vrot.lane.b32.xlu0 %v61, 112
    %v531 = vpop.permute.xlu0 %530
    %532 = vrot.lane.b32.xlu0 %v62, 112
    %v533 = vpop.permute.xlu0 %532
    %534 = vrot.lane.b32.xlu0 %v63, 112
    %v535 = vpop.permute.xlu0 %534
    %vm550 = vcmask 1048448
    %551 = vst.msk [vmem:[#allocation2] sm:$0xff] %vm550, %v509
    %552 = vst.msk [vmem:[#allocation2 + $0x10] sm:$0xff] %vm550, %v511
    %553 = vst.msk [vmem:[#allocation2 + $0x20] sm:$0xff] %vm550, %v513
    %554 = vst.msk [vmem:[#allocation2 + $0x30] sm:$0xff] %vm550, %v515
    %555 = vst.msk [vmem:[#allocation2 + $0x40] sm:$0xff] %vm550, %v517
    %556 = vst.msk [vmem:[#allocation2 + $0x50] sm:$0xff] %vm550, %v519
    %557 = vst.msk [vmem:[#allocation2 + $0x60] sm:$0xff] %vm550, %v521
    %558 = vst.msk [vmem:[#allocation2 + $0x80] sm:$0xff] %vm550, %v523
    %559 = vst.msk [vmem:[#allocation2 + $0x90] sm:$0xff] %vm550, %v525
    %560 = vst.msk [vmem:[#allocation2 + $0xa0] sm:$0xff] %vm550, %v527
    %561 = vst.msk [vmem:[#allocation2 + $0xb0] sm:$0xff] %vm550, %v529
    %562 = vst.msk [vmem:[#allocation2 + $0xc0] sm:$0xff] %vm550, %v531
    %563 = vst.msk [vmem:[#allocation2 + $0xd0] sm:$0xff] %vm550, %v533
    %564 = vst.msk [vmem:[#allocation2 + $0xe0] sm:$0xff] %vm550, %v535
    %vm579 = vcmask 129024
    %580 = vst.msk [vmem:[#allocation2 + $0x8] sm:$0x7f] %vm579, %v180
    %581 = vst.msk [vmem:[#allocation2 + $0x18] sm:$0x7f] %vm579, %v181
    %582 = vst.msk [vmem:[#allocation2 + $0x28] sm:$0x7f] %vm579, %v182
    %583 = vst.msk [vmem:[#allocation2 + $0x38] sm:$0x7f] %vm579, %v183
    %584 = vst.msk [vmem:[#allocation2 + $0x48] sm:$0x7f] %vm579, %v184
    %585 = vst.msk [vmem:[#allocation2 + $0x58] sm:$0x7f] %vm579, %v185
    %586 = vst.msk [vmem:[#allocation2 + $0x68] sm:$0x7f] %vm579, %v384
    %587 = vst.msk [vmem:[#allocation2 + $0x88] sm:$0x7f] %vm579, %v187
    %588 = vst.msk [vmem:[#allocation2 + $0x98] sm:$0x7f] %vm579, %v188
    %589 = vst.msk [vmem:[#allocation2 + $0xa8] sm:$0x7f] %vm579, %v189
    %590 = vst.msk [vmem:[#allocation2 + $0xb8] sm:$0x7f] %vm579, %v190
    %591 = vst.msk [vmem:[#allocation2 + $0xc8] sm:$0x7f] %vm579, %v191
    %592 = vst.msk [vmem:[#allocation2 + $0xd8] sm:$0x7f] %vm579, %v192
    %593 = vst.msk [vmem:[#allocation2 + $0xe8] sm:$0x7f] %vm579, %v385
    %v594 = vld [vmem:[#allocation2] sm:$0xff]
    %v595 = vld [vmem:[#allocation2 + $0x8] sm:$0xff]
    %v596 = vld [vmem:[#allocation2 + $0x10] sm:$0xff]
    %v597 = vld [vmem:[#allocation2 + $0x18] sm:$0xff]
    %v598 = vld [vmem:[#allocation2 + $0x20] sm:$0xff]
    %v599 = vld [vmem:[#allocation2 + $0x28] sm:$0xff]
    %v600 = vld [vmem:[#allocation2 + $0x30] sm:$0xff]
    %v601 = vld [vmem:[#allocation2 + $0x38] sm:$0xff]
    %v602 = vld [vmem:[#allocation2 + $0x40] sm:$0xff]
    %v603 = vld [vmem:[#allocation2 + $0x48] sm:$0xff]
    %v604 = vld [vmem:[#allocation2 + $0x50] sm:$0xff]
    %v605 = vld [vmem:[#allocation2 + $0x58] sm:$0xff]
    %v606 = vld [vmem:[#allocation2 + $0x60] sm:$0xff]
    %v607 = vld [vmem:[#allocation2 + $0x68] sm:$0xff]
    %v608 = vld [vmem:[#allocation2 + $0x70] sm:$0xff]
    %v609 = vld [vmem:[#allocation2 + $0x78] sm:$0xff]
    %v610 = vld [vmem:[#allocation2 + $0x80] sm:$0xff]
    %v611 = vld [vmem:[#allocation2 + $0x88] sm:$0xff]
    %v612 = vld [vmem:[#allocation2 + $0x90] sm:$0xff]
    %v613 = vld [vmem:[#allocation2 + $0x98] sm:$0xff]
    %v614 = vld [vmem:[#allocation2 + $0xa0] sm:$0xff]
    %v615 = vld [vmem:[#allocation2 + $0xa8] sm:$0xff]
    %v616 = vld [vmem:[#allocation2 + $0xb0] sm:$0xff]
    %v617 = vld [vmem:[#allocation2 + $0xb8] sm:$0xff]
    %v618 = vld [vmem:[#allocation2 + $0xc0] sm:$0xff]
    %v619 = vld [vmem:[#allocation2 + $0xc8] sm:$0xff]
    %v620 = vld [vmem:[#allocation2 + $0xd0] sm:$0xff]
    %v621 = vld [vmem:[#allocation2 + $0xd8] sm:$0xff]
    %v622 = vld [vmem:[#allocation2 + $0xe0] sm:$0xff]
    %v623 = vld [vmem:[#allocation2 + $0xe8] sm:$0xff]
    %v624 = vld [vmem:[#allocation2 + $0xf0] sm:$0xff]
    %v625 = vld [vmem:[#allocation2 + $0xf8] sm:$0xff]
    %v626 = vld [vmem:[%s1] sm:$0xff]
    %v627 = vld [vmem:[%s1 + $0x8] sm:$0xff]
    %v628 = vld [vmem:[%s1 + $0x10] sm:$0xff]
    %v629 = vld [vmem:[%s1 + $0x18] sm:$0xff]
    %v630 = vld [vmem:[%s1 + $0x20] sm:$0xff]
    %v631 = vld [vmem:[%s1 + $0x28] sm:$0xff]
    %v632 = vld [vmem:[%s1 + $0x30] sm:$0xff]
    %v633 = vld [vmem:[%s1 + $0x38] sm:$0xff]
    %v634 = vld [vmem:[%s1 + $0x40] sm:$0xff]
    %v635 = vld [vmem:[%s1 + $0x48] sm:$0xff]
    %v636 = vld [vmem:[%s1 + $0x50] sm:$0xff]
    %v637 = vld [vmem:[%s1 + $0x58] sm:$0xff]
    %v638 = vld [vmem:[%s1 + $0x60] sm:$0xff]
    %v639 = vld [vmem:[%s1 + $0x68] sm:$0xff]
    %v640 = vld [vmem:[%s1 + $0x70] sm:$0xff]
    %v641 = vld [vmem:[%s1 + $0x78] sm:$0xff]
    %v642 = vld [vmem:[%s1 + $0x80] sm:$0xff]
    %v643 = vld [vmem:[%s1 + $0x88] sm:$0xff]
    %v644 = vld [vmem:[%s2] sm:$0x1]
    %v646 = vlaneseq
    %v647 = vshrl.u32 %v646, 7
    %v648 = vsub.s32 0, %v647
    %v649 = vrot.slane %v644, %v648
    %v652 = vsel %vm16, %v595, 0
    %v655 = vsel %vm16, %v597, 0
    %v658 = vsel %vm16, %v599, 0
    %v661 = vsel %vm16, %v601, 0
    %v664 = vsel %vm16, %v603, 0
    %v667 = vsel %vm16, %v605, 0
    %v670 = vsel %vm16, %v607, 0
    %v673 = vsel %vm16, %v609, 0
    %v676 = vsel %vm16, %v611, 0
    %v679 = vsel %vm16, %v613, 0
    %v682 = vsel %vm16, %v615, 0
    %v685 = vsel %vm16, %v617, 0
    %v688 = vsel %vm16, %v619, 0
    %v691 = vsel %vm16, %v621, 0
    %v694 = vsel %vm16, %v623, 0
    %v697 = vsel %vm16, %v625, 0
    %699 = vmatprep.subr.mxu0 0.0
    %700 = vmatpush1.msra.mxu0 %v626
    %701 = vmatprep.subr.mxu0 0.0
    %702 = vmatpush1.msra.mxu0 %v627
    %703 = vmatprep.subr.mxu0 0.0
    %704 = vmatpush1.msra.mxu0 %v628
    %705 = vmatprep.subr.mxu0 0.0
    %706 = vmatpush1.msra.mxu0 %v629
    %707 = vmatprep.subr.mxu0 0.0
    %708 = vmatpush1.msra.mxu0 %v630
    %709 = vmatprep.subr.mxu0 0.0
    %710 = vmatpush1.msra.mxu0 %v631
    %711 = vmatprep.subr.mxu0 0.0
    %712 = vmatpush1.msra.mxu0 %v632
    %713 = vmatprep.subr.mxu0 0.0
    %714 = vmatpush1.msra.mxu0 %v633
    %715 = vmatprep.subr.mxu0 0.0
    %716 = vmatpush1.msra.mxu0 %v634
    %717 = vmatprep.subr.mxu0 0.0
    %718 = vmatpush1.msra.mxu0 %v635
    %719 = vmatprep.subr.mxu0 0.0
    %720 = vmatpush1.msra.mxu0 %v636
    %721 = vmatprep.subr.mxu0 0.0
    %722 = vmatpush1.msra.mxu0 %v637
    %723 = vmatprep.subr.mxu0 0.0
    %724 = vmatpush1.msra.mxu0 %v638
    %725 = vmatprep.subr.mxu0 0.0
    %726 = vmatpush1.msra.mxu0 %v639
    %727 = vmatprep.subr.mxu0 0.0
    %728 = vmatpush1.msra.mxu0 %v640
    %729 = vmatprep.subr.mxu0 0.0
    %730 = vmatpush1.msra.mxu0 %v641
    %731 = vmatprep.subr.mxu0 0.0
    %732 = vmatpush1.msra.mxu0 %v642
    %733 = vmatprep.subr.mxu0 0.0
    %734 = vmatpush1.msra.mxu0 %v643
    %735 = vmatprep.subr.mxu0 0.0
    %736 = vmatpush1.msra.mxu0 0.0
    %737 = vmatprep.subr.mxu0 0.0
    %738 = vmatpush1.msra.mxu0 0.0
    %739 = vmatprep.subr.mxu0 0.0
    %740 = vmatpush1.msra.mxu0 0.0
    %741 = vmatprep.subr.mxu0 0.0
    %742 = vmatpush1.msra.mxu0 0.0
    %743 = vmatprep.subr.mxu0 0.0
    %744 = vmatpush1.msra.mxu0 0.0
    %745 = vmatprep.subr.mxu0 0.0
    %746 = vmatpush1.msra.mxu0 0.0
    %747 = vmatprep.subr.mxu0 0.0
    %748 = vmatpush1.msra.mxu0 0.0
    %749 = vmatprep.subr.mxu0 0.0
    %750 = vmatpush1.msra.mxu0 0.0
    %751 = vmatprep.subr.mxu0 0.0
    %752 = vmatpush1.msra.mxu0 0.0
    %753 = vmatprep.subr.mxu0 0.0
    %754 = vmatpush1.msra.mxu0 0.0
    %755 = vmatprep.subr.mxu0 0.0
    %756 = vmatpush1.msra.mxu0 0.0
    %757 = vmatprep.subr.mxu0 0.0
    %758 = vmatpush1.msra.mxu0 0.0
    %759 = vmatprep.subr.mxu0 0.0
    %760 = vmatpush1.msra.mxu0 0.0
    %761 = vmatprep.subr.mxu0 0.0
    %762 = vmatpush1.msra.mxu0 0.0
    %763 = vmatprep.mubr.f32.mxu0 %v652
    %764 = vmatmul.mubr.f32.gmra.mrb[0].mxu0 %v594
    %v765 = vpop.f32.mrb[0].mxu0
    %v766 = vadd.f32 %v649, %v765
    %v767 = vpop.f32.mrb[0].mxu0
    %768 = vmatprep.mubr.f32.mxu0 %v655
    %769 = vmatmul.mubr.f32.gmra.mrb[0].mxu0 %v596
    %v770 = vpop.f32.mrb[0].mxu0
    %v771 = vadd.f32 %v649, %v770
    %v772 = vpop.f32.mrb[0].mxu0
    %773 = vmatprep.mubr.f32.mxu0 %v658
    %774 = vmatmul.mubr.f32.gmra.mrb[0].mxu0 %v598
    %v775 = vpop.f32.mrb[0].mxu0
    %v776 = vadd.f32 %v649, %v775
    %v777 = vpop.f32.mrb[0].mxu0
    %778 = vmatprep.mubr.f32.mxu0 %v661
    %779 = vmatmul.mubr.f32.gmra.mrb[0].mxu0 %v600
    %v780 = vpop.f32.mrb[0].mxu0
    %v781 = vadd.f32 %v649, %v780
    %v782 = vpop.f32.mrb[0].mxu0
    %783 = vmatprep.mubr.f32.mxu0 %v664
    %784 = vmatmul.mubr.f32.gmra.mrb[0].mxu0 %v602
    %v785 = vpop.f32.mrb[0].mxu0
    %v786 = vadd.f32 %v649, %v785
    %v787 = vpop.f32.mrb[0].mxu0
    %788 = vmatprep.mubr.f32.mxu0 %v667
    %789 = vmatmul.mubr.f32.gmra.mrb[0].mxu0 %v604
    %v790 = vpop.f32.mrb[0].mxu0
    %v791 = vadd.f32 %v649, %v790
    %v792 = vpop.f32.mrb[0].mxu0
    %793 = vmatprep.mubr.f32.mxu0 %v670
    %794 = vmatmul.mubr.f32.gmra.mrb[0].mxu0 %v606
    %v795 = vpop.f32.mrb[0].mxu0
    %v796 = vadd.f32 %v649, %v795
    %v797 = vpop.f32.mrb[0].mxu0
    %798 = vmatprep.mubr.f32.mxu0 %v673
    %799 = vmatmul.mubr.f32.gmra.mrb[0].mxu0 %v608
    %v800 = vpop.f32.mrb[0].mxu0
    %v801 = vadd.f32 %v649, %v800
    %v802 = vpop.f32.mrb[0].mxu0
    %803 = vmatprep.mubr.f32.mxu0 %v676
    %804 = vmatmul.mubr.f32.gmra.mrb[0].mxu0 %v610
    %v805 = vpop.f32.mrb[0].mxu0
    %v806 = vadd.f32 %v649, %v805
    %v807 = vpop.f32.mrb[0].mxu0
    %808 = vmatprep.mubr.f32.mxu0 %v679
    %809 = vmatmul.mubr.f32.gmra.mrb[0].mxu0 %v612
    %v810 = vpop.f32.mrb[0].mxu0
    %v811 = vadd.f32 %v649, %v810
    %v812 = vpop.f32.mrb[0].mxu0
    %813 = vmatprep.mubr.f32.mxu0 %v682
    %814 = vmatmul.mubr.f32.gmra.mrb[0].mxu0 %v614
    %v815 = vpop.f32.mrb[0].mxu0
    %v816 = vadd.f32 %v649, %v815
    %v817 = vpop.f32.mrb[0].mxu0
    %818 = vmatprep.mubr.f32.mxu0 %v685
    %819 = vmatmul.mubr.f32.gmra.mrb[0].mxu0 %v616
    %v820 = vpop.f32.mrb[0].mxu0
    %v821 = vadd.f32 %v649, %v820
    %v822 = vpop.f32.mrb[0].mxu0
    %823 = vmatprep.mubr.f32.mxu0 %v688
    %824 = vmatmul.mubr.f32.gmra.mrb[0].mxu0 %v618
    %v825 = vpop.f32.mrb[0].mxu0
    %v826 = vadd.f32 %v649, %v825
    %v827 = vpop.f32.mrb[0].mxu0
    %828 = vmatprep.mubr.f32.mxu0 %v691
    %829 = vmatmul.mubr.f32.gmra.mrb[0].mxu0 %v620
    %v830 = vpop.f32.mrb[0].mxu0
    %v831 = vadd.f32 %v649, %v830
    %v832 = vpop.f32.mrb[0].mxu0
    %833 = vmatprep.mubr.f32.mxu0 %v694
    %834 = vmatmul.mubr.f32.gmra.mrb[0].mxu0 %v622
    %v835 = vpop.f32.mrb[0].mxu0
    %v836 = vadd.f32 %v649, %v835
    %v837 = vpop.f32.mrb[0].mxu0
    %838 = vmatprep.mubr.f32.mxu0 %v697
    %839 = vmatmul.mubr.f32.gmra.mrb[0].mxu0 %v624
    %v840 = vpop.f32.mrb[0].mxu0
    %v841 = vadd.f32 %v649, %v840
    %v842 = vpop.f32.mrb[0].mxu0
    %843 = vdwg.mxu0
    %vm844 = vcmask 523264
    %845 = vst.msk [vmem:[#allocation3] sm:$0xff] %vm844, %v766
    %846 = vst.msk [vmem:[#allocation3 + $0x8] sm:$0xff] %vm844, %v771
    %847 = vst.msk [vmem:[#allocation3 + $0x10] sm:$0xff] %vm844, %v776
    %848 = vst.msk [vmem:[#allocation3 + $0x18] sm:$0xff] %vm844, %v781
    %849 = vst.msk [vmem:[#allocation3 + $0x20] sm:$0xff] %vm844, %v786
    %850 = vst.msk [vmem:[#allocation3 + $0x28] sm:$0xff] %vm844, %v791
    %851 = vst.msk [vmem:[#allocation3 + $0x30] sm:$0xff] %vm844, %v796
    %852 = vst.msk [vmem:[#allocation3 + $0x38] sm:$0xff] %vm844, %v801
    %853 = vst.msk [vmem:[#allocation3 + $0x40] sm:$0xff] %vm844, %v806
    %854 = vst.msk [vmem:[#allocation3 + $0x48] sm:$0xff] %vm844, %v811
    %855 = vst.msk [vmem:[#allocation3 + $0x50] sm:$0xff] %vm844, %v816
    %856 = vst.msk [vmem:[#allocation3 + $0x58] sm:$0xff] %vm844, %v821
    %857 = vst.msk [vmem:[#allocation3 + $0x60] sm:$0xff] %vm844, %v826
    %858 = vst.msk [vmem:[#allocation3 + $0x68] sm:$0xff] %vm844, %v831
    %859 = vst.msk [vmem:[#allocation3 + $0x70] sm:$0xff] %vm844, %v836
    %860 = vst.msk [vmem:[#allocation3 + $0x78] sm:$0xff] %vm844, %v841
    // Predicated region
    $region14: #{tpu_custom_call.1} parent=1 // pred_check
      _
    $region15: #{tpu_custom_call.1} parent=1 // pred_check_branch
      %862 = sbr.rel (0) target = $region17
    $region16: #{tpu_custom_call.1} parent=1 // pred_region
      %s864 = ssub.s32 2048, 2048
      %865 = vsyncadd [#allocation4], %s864
      %s866 = sshll.u32 [#allocation3], 4
      %s867 = int_to_ptr.vmem [resolvable:$true] %s866
      %872 = dma.vmem_to_hbm [thread:$0]  %s867, 2048, %s3, [#allocation4], 128, 128, 8
    $region17: #{tpu_custom_call.1} parent=1 // pred_fallthru
      _
    // Predicated region
    $region18: #{tpu_custom_call.1} parent=1 // pred_check
      _
    $region19: #{tpu_custom_call.1} parent=1 // pred_check_branch
      %874 = sbr.rel (0) target = $region21
    $region20: #{tpu_custom_call.1} parent=1 // pred_region
      %875 = dma.done [#allocation4], 2048
    $region21: #{tpu_custom_call.1} parent=1 // pred_fallthru
      _
    %876 = vsyncpa [#allocation4], 1

</llo_original>
